<compile_context>
chip_gen: v7x
topology: tpu7x:2x2x1
jax: 0.10.0
libtpu: 0.0.40
codegen_flags: <defaults>
</compile_context>

<pallas_src>
import math
from functools import partial

import jax
import jax.numpy as jnp
import numpy as np
from jax.experimental import pallas as pl
from jax.experimental.pallas import tpu as pltpu


def _round_up(x: int, m: int) -> int:
    return (x + m - 1) // m * m


def _sincond_kernel(t_ref, basis_ref, phase_ref, w1_ref, b1_ref, w2_ref, b2_ref,
                    z_ref, o_ref):
    # t_ref:(tm,1) basis/phase:(1,d_enc) w1:(d_enc,D) b1:(1,D) w2:(D,D) b2:(1,D)
    # z_ref/o_ref:(tm,D)
    # Sinusoidal encoding: [cos(t*b), sin(t*b)] == cos(t*[b,b] + [0,-pi/2]).
    enc = jnp.cos(t_ref[...] * basis_ref[...] + phase_ref[...])          # (tm, d_enc)
    h = jnp.dot(enc, w1_ref[...], preferred_element_type=jnp.float32) + b1_ref[...]
    h = h * (1.0 / (1.0 + jnp.exp(-h)))                                  # SiLU in f32
    y = jnp.dot(h, w2_ref[...], preferred_element_type=jnp.float32) + b2_ref[...]
    o_ref[...] = (z_ref[...] + y).astype(o_ref.dtype)


def sinusoidal_conditioning_forward(z, t, basis, w1_torch, b1, w2_torch, b2,
                                    *, tile_m: int = 256):
    """z: (..., d_model); t: (...,) or (..., 1) matching z's leading dims.

    basis: (d_enc//2,) sinusoidal frequencies (the module's registered buffer).
    w1_torch: (d_model, d_enc), w2_torch: (d_model, d_model)  -- PyTorch Linear layout.
    """
    d_model = z.shape[-1]
    d_enc = w1_torch.shape[1]
    half = d_enc // 2
    lead_shape = z.shape[:-1]
    m = int(np.prod(lead_shape)) if lead_shape else 1

    # ---- host-side glue: flatten, transpose weights, lane-pad d_model ----
    t_flat = jnp.reshape(t, (m, 1)).astype(jnp.float32)
    z_flat = jnp.reshape(z, (m, d_model))

    w1 = jnp.asarray(w1_torch, jnp.float32).T                    # (d_enc, d_model)
    w2 = jnp.asarray(w2_torch, jnp.float32).T                    # (d_model, d_model)
    b1_2d = jnp.asarray(b1, jnp.float32).reshape(1, d_model)
    b2_2d = jnp.asarray(b2, jnp.float32).reshape(1, d_model)

    dmp = _round_up(d_model, 128)                                # lane-dense output dim
    if dmp != d_model:
        pad_d = dmp - d_model
        w1 = jnp.pad(w1, ((0, 0), (0, pad_d)))
        w2 = jnp.pad(w2, ((0, pad_d), (0, pad_d)))
        b1_2d = jnp.pad(b1_2d, ((0, 0), (0, pad_d)))
        b2_2d = jnp.pad(b2_2d, ((0, 0), (0, pad_d)))
        z_flat = jnp.pad(z_flat, ((0, 0), (0, pad_d)))

    # cos-only encoding: duplicate frequencies and give the second half a -pi/2 phase.
    basis_f = jnp.asarray(basis, jnp.float32).reshape(-1)
    basis_full = jnp.concatenate([basis_f, basis_f]).reshape(1, d_enc)
    phase = jnp.concatenate(
        [jnp.zeros((half,), jnp.float32),
         jnp.full((half,), -0.5 * np.pi, jnp.float32)]).reshape(1, d_enc)

    # ---- M tiling (row-pad so the grid divides evenly) ----
    tm = min(tile_m, _round_up(m, 8))
    m_pad = _round_up(m, tm)
    if m_pad != m:
        t_flat = jnp.pad(t_flat, ((0, m_pad - m), (0, 0)))
        z_flat = jnp.pad(z_flat, ((0, m_pad - m), (0, 0)))
    grid = (m_pad // tm,)

    cost = pl.CostEstimate(
        flops=2 * m_pad * d_enc * dmp + 2 * m_pad * dmp * dmp + 5 * m_pad * dmp,
        transcendentals=m_pad * (d_enc + dmp),
        bytes_accessed=4 * (m_pad + 2 * d_enc + d_enc * dmp + dmp * dmp + 2 * dmp
                            + 2 * m_pad * dmp),
    )

    out = pl.pallas_call(
        _sincond_kernel,
        out_shape=jax.ShapeDtypeStruct((m_pad, dmp), z.dtype),
        grid=grid,
        in_specs=[
            pl.BlockSpec((tm, 1), lambda i: (i, 0)),          # t rows for this tile
            pl.BlockSpec((1, d_enc), lambda i: (0, 0)),       # basis  (resident)
            pl.BlockSpec((1, d_enc), lambda i: (0, 0)),       # phase  (resident)
            pl.BlockSpec((d_enc, dmp), lambda i: (0, 0)),     # W1^T   (resident)
            pl.BlockSpec((1, dmp), lambda i: (0, 0)),         # b1     (resident)
            pl.BlockSpec((dmp, dmp), lambda i: (0, 0)),       # W2^T   (resident)
            pl.BlockSpec((1, dmp), lambda i: (0, 0)),         # b2     (resident)
            pl.BlockSpec((tm, dmp), lambda i: (i, 0)),        # z rows for this tile
        ],
        out_specs=pl.BlockSpec((tm, dmp), lambda i: (i, 0)),
        compiler_params=pltpu.CompilerParams(
            dimension_semantics=("parallel",)),
        cost_estimate=cost,
    )(t_flat, basis_full, phase, w1, b1_2d, w2, b2_2d, z_flat)

    return out[:m, :d_model].reshape(*lead_shape, d_model)


if __name__ == "__main__":
    # Small shapes consistent with the module: z (B, S, d_model), t (B, S).
    d_model, d_enc = 128, 32
    batch, seq = 2, 8

    key = jax.random.PRNGKey(0)
    kz, kt, kw1, kb1, kw2, kb2 = jax.random.split(key, 6)

    z = jax.random.normal(kz, (batch, seq, d_model), dtype=jnp.float32)
    t = jax.random.uniform(kt, (batch, seq), minval=-3.0, maxval=3.0,
                           dtype=jnp.float32)

    # Deterministic nn.Linear-style init (uniform in +/- 1/sqrt(fan_in)).
    bound1 = 1.0 / math.sqrt(d_enc)
    w1_torch = jax.random.uniform(kw1, (d_model, d_enc), minval=-bound1,
                                  maxval=bound1, dtype=jnp.float32)
    b1 = jax.random.uniform(kb1, (d_model,), minval=-bound1, maxval=bound1,
                            dtype=jnp.float32)
    bound2 = 1.0 / math.sqrt(d_model)
    w2_torch = jax.random.uniform(kw2, (d_model, d_model), minval=-bound2,
                                  maxval=bound2, dtype=jnp.float32)
    b2 = jax.random.uniform(kb2, (d_model,), minval=-bound2, maxval=bound2,
                            dtype=jnp.float32)

    # SinusoidalEncoding buffer: basis = 1 / 10000**(k/half), k = 0..half-1.
    half = d_enc // 2
    basis = 1.0 / jnp.power(10000.0, jnp.arange(half, dtype=jnp.float32) / half)

    fwd = jax.jit(partial(sinusoidal_conditioning_forward, tile_m=256))
    out = jax.block_until_ready(fwd(z, t, basis, w1_torch, b1, w2_torch, b2))

    # Pure-JAX reference replicating the PyTorch module exactly.
    arg = t[..., None] * basis                                   # (B, S, half)
    enc = jnp.concatenate([jnp.cos(arg), jnp.sin(arg)], axis=-1)  # (B, S, d_enc)
    h = enc @ w1_torch.T + b1
    h = h * jax.nn.sigmoid(h)                                    # SiLU
    y = h @ w2_torch.T + b2
    ref = z + y

    assert out.shape == ref.shape, (out.shape, ref.shape)
    np.testing.assert_allclose(np.asarray(out), np.asarray(ref),
                               rtol=1e-4, atol=1e-5)
    print("KERNEL_OK")
</pallas_src>

<mosaic_0001>
module attributes {stable_mosaic.version = 11 : i64} {
  func.func @_sincond_kernel(%arg0: i32, %arg1: memref<16x1xf32, #tpu.memory_space<vmem>>, %arg2: memref<1x32xf32, #tpu.memory_space<vmem>>, %arg3: memref<1x32xf32, #tpu.memory_space<vmem>>, %arg4: memref<32x128xf32, #tpu.memory_space<vmem>>, %arg5: memref<1x128xf32, #tpu.memory_space<vmem>>, %arg6: memref<128x128xf32, #tpu.memory_space<vmem>>, %arg7: memref<1x128xf32, #tpu.memory_space<vmem>>, %arg8: memref<16x128xf32, #tpu.memory_space<vmem>>, %arg9: memref<16x128xf32, #tpu.memory_space<vmem>>) attributes {dimension_semantics = [#tpu.dimension_semantics<parallel>], iteration_bounds = array<i64: 1>, scalar_prefetch = 0 : i64, scratch_operands = 0 : i64, tpu.core_type = #tpu.core_type<tc>, window_params = [{transform_indices = @transform_0, window_bounds = array<i64: 16, 1>}, {pipeline_mode = #tpu.pipeline_mode<synchronous>, transform_indices = @transform_1, window_bounds = array<i64: 1, 32>}, {pipeline_mode = #tpu.pipeline_mode<synchronous>, transform_indices = @transform_2, window_bounds = array<i64: 1, 32>}, {pipeline_mode = #tpu.pipeline_mode<synchronous>, transform_indices = @transform_3, window_bounds = array<i64: 32, 128>}, {pipeline_mode = #tpu.pipeline_mode<synchronous>, transform_indices = @transform_4, window_bounds = array<i64: 1, 128>}, {pipeline_mode = #tpu.pipeline_mode<synchronous>, transform_indices = @transform_5, window_bounds = array<i64: 128, 128>}, {pipeline_mode = #tpu.pipeline_mode<synchronous>, transform_indices = @transform_6, window_bounds = array<i64: 1, 128>}, {transform_indices = @transform_7, window_bounds = array<i64: 16, 128>}, {transform_indices = @transform_8, window_bounds = array<i64: 16, 128>}]} {
    %c0 = arith.constant 0 : index
    %c0_0 = arith.constant 0 : index
    %0 = vector.load %arg1[%c0, %c0_0] : memref<16x1xf32, #tpu.memory_space<vmem>>, vector<16x1xf32>
    %c0_1 = arith.constant 0 : index
    %c0_2 = arith.constant 0 : index
    %1 = vector.load %arg2[%c0_1, %c0_2] : memref<1x32xf32, #tpu.memory_space<vmem>>, vector<1x32xf32>
    %2 = vector.broadcast %0 : vector<16x1xf32> to vector<16x32xf32>
    %3 = vector.broadcast %1 : vector<1x32xf32> to vector<16x32xf32>
    %4 = arith.mulf %2, %3 : vector<16x32xf32>
    %c0_3 = arith.constant 0 : index
    %c0_4 = arith.constant 0 : index
    %5 = vector.load %arg3[%c0_3, %c0_4] : memref<1x32xf32, #tpu.memory_space<vmem>>, vector<1x32xf32>
    %6 = vector.broadcast %5 : vector<1x32xf32> to vector<16x32xf32>
    %7 = arith.addf %4, %6 : vector<16x32xf32>
    %8 = math.cos %7 : vector<16x32xf32>
    %c0_5 = arith.constant 0 : index
    %c0_6 = arith.constant 0 : index
    %9 = vector.load %arg4[%c0_5, %c0_6] : memref<32x128xf32, #tpu.memory_space<vmem>>, vector<32x128xf32>
    %cst = arith.constant dense<0.000000e+00> : vector<16x128xf32>
    %10 = tpu.matmul %8, %9, %cst {dimension_numbers = #tpu.dot_dimension_numbers<[1], [0], [0], [1], [0, 0, 1, 1], [], []>} : vector<16x32xf32>, vector<32x128xf32>, vector<16x128xf32> -> vector<16x128xf32>
    %c0_7 = arith.constant 0 : index
    %c0_8 = arith.constant 0 : index
    %11 = vector.load %arg5[%c0_7, %c0_8] : memref<1x128xf32, #tpu.memory_space<vmem>>, vector<1x128xf32>
    %12 = vector.broadcast %11 : vector<1x128xf32> to vector<16x128xf32>
    %13 = arith.addf %10, %12 : vector<16x128xf32>
    %cst_9 = arith.constant 0.000000e+00 : f32
    %14 = vector.broadcast %cst_9 : f32 to vector<16x128xf32>
    %15 = arith.subf %14, %13 : vector<16x128xf32>
    %16 = math.exp %15 : vector<16x128xf32>
    %cst_10 = arith.constant 1.000000e+00 : f32
    %17 = vector.broadcast %cst_10 : f32 to vector<16x128xf32>
    %18 = arith.addf %17, %16 : vector<16x128xf32>
    %cst_11 = arith.constant 1.000000e+00 : f32
    %19 = vector.broadcast %cst_11 : f32 to vector<16x128xf32>
    %20 = arith.divf %19, %18 : vector<16x128xf32>
    %21 = arith.mulf %13, %20 : vector<16x128xf32>
    %c0_12 = arith.constant 0 : index
    %c0_13 = arith.constant 0 : index
    %22 = vector.load %arg6[%c0_12, %c0_13] : memref<128x128xf32, #tpu.memory_space<vmem>>, vector<128x128xf32>
    %cst_14 = arith.constant dense<0.000000e+00> : vector<16x128xf32>
    %23 = tpu.matmul %21, %22, %cst_14 {dimension_numbers = #tpu.dot_dimension_numbers<[1], [0], [0], [1], [0, 0, 1, 1], [], []>} : vector<16x128xf32>, vector<128x128xf32>, vector<16x128xf32> -> vector<16x128xf32>
    %c0_15 = arith.constant 0 : index
    %c0_16 = arith.constant 0 : index
    %24 = vector.load %arg7[%c0_15, %c0_16] : memref<1x128xf32, #tpu.memory_space<vmem>>, vector<1x128xf32>
    %25 = vector.broadcast %24 : vector<1x128xf32> to vector<16x128xf32>
    %26 = arith.addf %23, %25 : vector<16x128xf32>
    %c0_17 = arith.constant 0 : index
    %c0_18 = arith.constant 0 : index
    %27 = vector.load %arg8[%c0_17, %c0_18] : memref<16x128xf32, #tpu.memory_space<vmem>>, vector<16x128xf32>
    %28 = arith.addf %27, %26 : vector<16x128xf32>
    %c0_19 = arith.constant 0 : index
    %c0_20 = arith.constant 0 : index
    %29 = vector.load %arg9[%c0_19, %c0_20] : memref<16x128xf32, #tpu.memory_space<vmem>>, vector<16x128xf32>
    tpu.vector_store %arg9[%c0_19, %c0_20], %28 {strides = array<i32>} : memref<16x128xf32, #tpu.memory_space<vmem>>, vector<16x128xf32>,
    return
  }
  func.func @transform_0(%arg0: i32) -> (i32, i32) {
    %c0_i32 = arith.constant 0 : i32
    %c0_i32_0 = arith.constant 0 : i32
    return %arg0, %c0_i32 : i32, i32
  }
  func.func @transform_1(%arg0: i32) -> (i32, i32) {
    %c0_i32 = arith.constant 0 : i32
    %c0_i32_0 = arith.constant 0 : i32
    %c0_i32_1 = arith.constant 0 : i32
    return %c0_i32, %c0_i32_0 : i32, i32
  }
  func.func @transform_2(%arg0: i32) -> (i32, i32) {
    %c0_i32 = arith.constant 0 : i32
    %c0_i32_0 = arith.constant 0 : i32
    %c0_i32_1 = arith.constant 0 : i32
    return %c0_i32, %c0_i32_0 : i32, i32
  }
  func.func @transform_3(%arg0: i32) -> (i32, i32) {
    %c0_i32 = arith.constant 0 : i32
    %c0_i32_0 = arith.constant 0 : i32
    %c0_i32_1 = arith.constant 0 : i32
    return %c0_i32, %c0_i32_0 : i32, i32
  }
  func.func @transform_4(%arg0: i32) -> (i32, i32) {
    %c0_i32 = arith.constant 0 : i32
    %c0_i32_0 = arith.constant 0 : i32
    %c0_i32_1 = arith.constant 0 : i32
    return %c0_i32, %c0_i32_0 : i32, i32
  }
  func.func @transform_5(%arg0: i32) -> (i32, i32) {
    %c0_i32 = arith.constant 0 : i32
    %c0_i32_0 = arith.constant 0 : i32
    %c0_i32_1 = arith.constant 0 : i32
    return %c0_i32, %c0_i32_0 : i32, i32
  }
  func.func @transform_6(%arg0: i32) -> (i32, i32) {
    %c0_i32 = arith.constant 0 : i32
    %c0_i32_0 = arith.constant 0 : i32
    %c0_i32_1 = arith.constant 0 : i32
    return %c0_i32, %c0_i32_0 : i32, i32
  }
  func.func @transform_7(%arg0: i32) -> (i32, i32) {
    %c0_i32 = arith.constant 0 : i32
    %c0_i32_0 = arith.constant 0 : i32
    return %arg0, %c0_i32 : i32, i32
  }
  func.func @transform_8(%arg0: i32) -> (i32, i32) {
    %c0_i32 = arith.constant 0 : i32
    %c0_i32_0 = arith.constant 0 : i32
    return %arg0, %c0_i32 : i32, i32
  }
}

</mosaic_0001>

<llo_original>
// kernel: sinusoidal_conditioning_forward.1
$region0: #{sinusoidal_conditioning_forward.1}
  #allocation0 [shape = 'u32[]', space=smem, size = 0x4, offset = 0x4, fixed_abs, tag = 'smem constant byte address 0x4 - core index']
  #allocation1 [shape = 'u32[144,128]{1,0:T(1,128)}', space=vmem, size = 0x12000, scoped, tag = 'internal scratch']
  %s0 = inlined_call_operand.vmem [shape: f32[16,1], index: 0, kind: input, shape index: {}]
  %s1 = inlined_call_operand.vmem [shape: f32[1,32], index: 1, kind: input, shape index: {}]
  %s2 = inlined_call_operand.vmem [shape: f32[1,32], index: 2, kind: input, shape index: {}]
  %s3 = inlined_call_operand.vmem [shape: f32[32,128], index: 3, kind: input, shape index: {}]
  %s4 = inlined_call_operand.vmem [shape: f32[1,128], index: 4, kind: input, shape index: {}]
  %s5 = inlined_call_operand.vmem [shape: f32[128,128], index: 5, kind: input, shape index: {}]
  %s6 = inlined_call_operand.vmem [shape: f32[1,128], index: 6, kind: input, shape index: {}]
  %s7 = inlined_call_operand.vmem [shape: f32[16,128], index: 7, kind: input, shape index: {}]
  %s8 = inlined_call_operand.hbm [shape: f32[16,128], index: 8, kind: output, shape index: {}]
  %s9 = sld [smem:[#allocation0]]
  $region42: #{sinusoidal_conditioning_forward.1} parent=0
    _
  %s11 = ssub.s32 1, %s9
  %s12 = scalar_select 0, %s11, %s9
  $region1: #{sinusoidal_conditioning_forward.1} parent=0
    #allocation2 [shape = 'u8[8192]{0}', space=vmem, size = 0x2000, scoped, tag = 'output window, operand 0, single buffered']
    #allocation3 [shape = 's32[1]{0}', space=sflag, size = 0x4, scoped, tag = 'scoped memory for sinusoidal_conditioning_forward.1']
    %13 = vsyncpa [#allocation3], 0
    // Predicated region
    $region2: #{sinusoidal_conditioning_forward.1} parent=1 // pred_check
      _
    $region3: #{sinusoidal_conditioning_forward.1} parent=1 // pred_check_branch
      %15 = sbr.rel (0) target = $region5
    $region4: #{sinusoidal_conditioning_forward.1} parent=1 // pred_region
      _
    $region5: #{sinusoidal_conditioning_forward.1} parent=1 // pred_fallthru
      _
    // Predicated region
    $region6: #{sinusoidal_conditioning_forward.1} parent=1 // pred_check
      _
    $region7: #{sinusoidal_conditioning_forward.1} parent=1 // pred_check_branch
      %17 = sbr.rel (0) target = $region9
    $region8: #{sinusoidal_conditioning_forward.1} parent=1 // pred_region
      _
    $region9: #{sinusoidal_conditioning_forward.1} parent=1 // pred_fallthru
      _
    // Predicated region
    $region10: #{sinusoidal_conditioning_forward.1} parent=1 // pred_check
      _
    $region11: #{sinusoidal_conditioning_forward.1} parent=1 // pred_check_branch
      %19 = sbr.rel (0) target = $region13
    $region12: #{sinusoidal_conditioning_forward.1} parent=1 // pred_region
      _
    $region13: #{sinusoidal_conditioning_forward.1} parent=1 // pred_fallthru
      _
    // Predicated region
    $region14: #{sinusoidal_conditioning_forward.1} parent=1 // pred_check
      _
    $region15: #{sinusoidal_conditioning_forward.1} parent=1 // pred_check_branch
      %21 = sbr.rel (0) target = $region17
    $region16: #{sinusoidal_conditioning_forward.1} parent=1 // pred_region
      _
    $region17: #{sinusoidal_conditioning_forward.1} parent=1 // pred_fallthru
      _
    // Predicated region
    $region18: #{sinusoidal_conditioning_forward.1} parent=1 // pred_check
      _
    $region19: #{sinusoidal_conditioning_forward.1} parent=1 // pred_check_branch
      %23 = sbr.rel (0) target = $region21
    $region20: #{sinusoidal_conditioning_forward.1} parent=1 // pred_region
      _
    $region21: #{sinusoidal_conditioning_forward.1} parent=1 // pred_fallthru
      _
    // Predicated region
    $region22: #{sinusoidal_conditioning_forward.1} parent=1 // pred_check
      _
    $region23: #{sinusoidal_conditioning_forward.1} parent=1 // pred_check_branch
      %25 = sbr.rel (0) target = $region25
    $region24: #{sinusoidal_conditioning_forward.1} parent=1 // pred_region
      _
    $region25: #{sinusoidal_conditioning_forward.1} parent=1 // pred_fallthru
      _
    // Predicated region
    $region26: #{sinusoidal_conditioning_forward.1} parent=1 // pred_check
      _
    $region27: #{sinusoidal_conditioning_forward.1} parent=1 // pred_check_branch
      %27 = sbr.rel (0) target = $region29
    $region28: #{sinusoidal_conditioning_forward.1} parent=1 // pred_region
      _
    $region29: #{sinusoidal_conditioning_forward.1} parent=1 // pred_fallthru
      _
    // Predicated region
    $region30: #{sinusoidal_conditioning_forward.1} parent=1 // pred_check
      _
    $region31: #{sinusoidal_conditioning_forward.1} parent=1 // pred_check_branch
      %29 = sbr.rel (0) target = $region33
    $region32: #{sinusoidal_conditioning_forward.1} parent=1 // pred_region
      _
    $region33: #{sinusoidal_conditioning_forward.1} parent=1 // pred_fallthru
      _
    %v30 = vld [vmem:[%s0] sm:$0xff]
    %v31 = vld [vmem:[%s0 + $0x8] sm:$0xff]
    %v32 = vld [vmem:[%s1] sm:$0x1]
    %34 = vset.pattern.permute.xlu0 0
    %35 = vperm.xlu0 %34, %v30
    %v36 = vpop.permute.xlu0 %35
    %39 = vset.pattern.permute.xlu0 0
    %40 = vperm.xlu0 %39, %v31
    %v41 = vpop.permute.xlu0 %40
    %v44 = vlaneseq
    %v45 = vshrl.u32 %v44, 7
    %v46 = vsub.s32 0, %v45
    %v47 = vrot.slane %v32, %v46
    %v49 = vmul.f32 %v36, %v47
    %v50 = vmul.f32 %v41, %v47
    %v51 = vld [vmem:[%s2] sm:$0x1]
    %v53 = vlaneseq
    %v54 = vshrl.u32 %v53, 7
    %v55 = vsub.s32 0, %v54
    %v56 = vrot.slane %v51, %v55
    %v58 = vadd.f32 %v49, %v56
    %v59 = vadd.f32 %v50, %v56
    %v60 = vand.u32 2147483647, %v58
    %vm61 = vcmp.le.f32.partialorder %v60, 0.7853982
    %vm62 = vcmp.lt.s32.totalorder %v58, 0
    %v63 = vand.u32 %v58, 2139095040
    %v64 = vshrl.u32 %v63, 23
    %v65 = vsub.s32 %v64, 127
    %v66 = vand.u32 2147483647, %v58
    %v67 = vand.u32 %v66, 8388607
    %v68 = vor.u32 %v67, 8388608
    %v69 = vsub.s32 0, %v68
    %v70 = vadd.s32 %v65, 1
    %vm71 = vcmp.gt.s32.totalorder %v70, 0
    %v72 = vsel %vm71, %v70, 0
    %v73 = vshrl.u32 %v72, 5
    %v74 = vand.u32 %v72, 31
    %v75 = vsub.s32 32, %v74
    %v76 = vshrl.u32 683565275, %v75
    %v77 = vshll.u32 683565275, %v74
    %v78 = vshrl.u32 2475754826, %v75
    %v79 = vor.u32 %v77, %v78
    %v80 = vshll.u32 2475754826, %v74
    %v81 = vshrl.u32 2131351028, %v75
    %v82 = vor.u32 %v80, %v81
    %v83 = vshll.u32 2131351028, %v74
    %v84 = vshrl.u32 2102212464, %v75
    %v85 = vor.u32 %v83, %v84
    %v86 = vshll.u32 2102212464, %v74
    %v87 = vshrl.u32 920167782, %v75
    %v88 = vor.u32 %v86, %v87
    %v89 = vshll.u32 920167782, %v74
    %v90 = vshrl.u32 1326507024, %v75
    %v91 = vor.u32 %v89, %v90
    %vm92 = vcmp.lt.s32.totalorder %v73, 1
    %vm93 = vcmp.lt.s32.totalorder %v73, 2
    %vm94 = vcmp.lt.s32.totalorder %v73, 3
    %vm95 = vcmp.lt.s32.totalorder %v73, 4
    %v96 = vsel %vm92, %v76, %v79
    %v97 = vsel %vm95, %v85, 2102212464
    %v98 = vsel %vm94, %v82, %v97
    %v99 = vsel %vm93, %v96, %v98
    %v100 = vsel %vm92, %v79, %v82
    %v101 = vsel %vm95, %v88, 920167782
    %v102 = vsel %vm94, %v85, %v101
    %v103 = vsel %vm93, %v100, %v102
    %v104 = vsel %vm92, %v82, %v85
    %v105 = vsel %vm95, %v91, 1326507024
    %v106 = vsel %vm94, %v88, %v105
    %v107 = vsel %vm93, %v104, %v106
    %v108 = vshll.u32 %v68, 8
    %v109 = vmul.u32.u64.compose %v108, %v107
    %v110 = vextract.low.u32 %v109
    %v111 = vextract.high.u32 %v109
    %v112 = vmul.u32.u64.compose %v108, %v103
    %v113 = vextract.low.u32 %v112
    %v114 = vextract.high.u32 %v112
    %v115 = vmul.u32 %v108, %v99
    %v116 = vadd.s32 %v111, %v113
    %vm117 = vc.u32 %v111, %v113
    %v118 = vadd.s32 %v114, 1
    %v119 = vsel %vm117, %v118, %v114
    %v120 = vadd.s32 %v115, %v119
    %v121 = vadd.s32 %v120, 536870912
    %v122 = vshrl.u32 %v121, 30
    %v123 = vshll.u32 %v122, 30
    %v124 = vsub.s32 %v120, %v123
    %vm125 = vcmp.lt.s32.totalorder %v124, 0
    %v126 = vsub.s32 0, %v124
    %v127 = vsel %vm125, %v126, %v124
    %v128 = vclz %v127
    %v129 = vsub.s32 %v128, 2
    %vm130 = vcmp.gt.s32.totalorder 0, %v129
    %v131 = vsel %vm130, 0, %v129
    %v132 = vsub.s32 32, %v131
    %v133 = vshll.u32 %v124, %v131
    %v134 = vshrl.u32 %v116, %v132
    %v135 = vor.u32 %v133, %v134
    %v136 = vsub.s32 4294967266, %v131
    %v137 = vadd.s32 %v136, 127
    %v138 = vshll.u32 %v137, 23
    %v139 = vor.u32 4788187, %v138
    %v140 = vand.u32 2147483647, %v139
    %v142 = vcvt.s32.f32 %v135
    %v143 = vmul.f32 %v142, %v140
    %v144 = vxor.u32 %v143, 2147483648
    %v145 = vsel %vm62, %v144, %v143
    %v146 = vsub.s32 4, %v122
    %v147 = vsel %vm62, %v146, %v122
    %v148 = vsel %vm61, %v58, %v145
    %v149 = vsel %vm61, 0, %v147
    %v150 = vcosq.f32.pop %v148
    %v151 = vsinq.f32.pop %v148
    %vm152 = vweird.f32 %v58
    %v153 = vand.u32 %v149, 3
    %vm154 = vcmp.lt.s32.totalorder %v153, 2
    %vm155 = vcmp.eq.s32.totalorder %v153, 0
    %v156 = vxor.u32 %v151, 2147483648
    %v157 = vsel %vm155, %v150, %v156
    %vm158 = vcmp.eq.s32.totalorder %v153, 2
    %v159 = vxor.u32 %v150, 2147483648
    %v160 = vsel %vm158, %v159, %v151
    %v161 = vsel %vm154, %v157, %v160
    %v162 = vsel %vm152, nan, %v161
    %v163 = vand.u32 2147483647, %v59
    %vm164 = vcmp.le.f32.partialorder %v163, 0.7853982
    %vm165 = vcmp.lt.s32.totalorder %v59, 0
    %v166 = vand.u32 %v59, 2139095040
    %v167 = vshrl.u32 %v166, 23
    %v168 = vsub.s32 %v167, 127
    %v169 = vand.u32 2147483647, %v59
    %v170 = vand.u32 %v169, 8388607
    %v171 = vor.u32 %v170, 8388608
    %v172 = vsub.s32 0, %v171
    %v173 = vadd.s32 %v168, 1
    %vm174 = vcmp.gt.s32.totalorder %v173, 0
    %v175 = vsel %vm174, %v173, 0
    %v176 = vshrl.u32 %v175, 5
    %v177 = vand.u32 %v175, 31
    %v178 = vsub.s32 32, %v177
    %v179 = vshrl.u32 683565275, %v178
    %v180 = vshll.u32 683565275, %v177
    %v181 = vshrl.u32 2475754826, %v178
    %v182 = vor.u32 %v180, %v181
    %v183 = vshll.u32 2475754826, %v177
    %v184 = vshrl.u32 2131351028, %v178
    %v185 = vor.u32 %v183, %v184
    %v186 = vshll.u32 2131351028, %v177
    %v187 = vshrl.u32 2102212464, %v178
    %v188 = vor.u32 %v186, %v187
    %v189 = vshll.u32 2102212464, %v177
    %v190 = vshrl.u32 920167782, %v178
    %v191 = vor.u32 %v189, %v190
    %v192 = vshll.u32 920167782, %v177
    %v193 = vshrl.u32 1326507024, %v178
    %v194 = vor.u32 %v192, %v193
    %vm195 = vcmp.lt.s32.totalorder %v176, 1
    %vm196 = vcmp.lt.s32.totalorder %v176, 2
    %vm197 = vcmp.lt.s32.totalorder %v176, 3
    %vm198 = vcmp.lt.s32.totalorder %v176, 4
    %v199 = vsel %vm195, %v179, %v182
    %v200 = vsel %vm198, %v188, 2102212464
    %v201 = vsel %vm197, %v185, %v200
    %v202 = vsel %vm196, %v199, %v201
    %v203 = vsel %vm195, %v182, %v185
    %v204 = vsel %vm198, %v191, 920167782
    %v205 = vsel %vm197, %v188, %v204
    %v206 = vsel %vm196, %v203, %v205
    %v207 = vsel %vm195, %v185, %v188
    %v208 = vsel %vm198, %v194, 1326507024
    %v209 = vsel %vm197, %v191, %v208
    %v210 = vsel %vm196, %v207, %v209
    %v211 = vshll.u32 %v171, 8
    %v212 = vmul.u32.u64.compose %v211, %v210
    %v213 = vextract.low.u32 %v212
    %v214 = vextract.high.u32 %v212
    %v215 = vmul.u32.u64.compose %v211, %v206
    %v216 = vextract.low.u32 %v215
    %v217 = vextract.high.u32 %v215
    %v218 = vmul.u32 %v211, %v202
    %v219 = vadd.s32 %v214, %v216
    %vm220 = vc.u32 %v214, %v216
    %v221 = vadd.s32 %v217, 1
    %v222 = vsel %vm220, %v221, %v217
    %v223 = vadd.s32 %v218, %v222
    %v224 = vadd.s32 %v223, 536870912
    %v225 = vshrl.u32 %v224, 30
    %v226 = vshll.u32 %v225, 30
    %v227 = vsub.s32 %v223, %v226
    %vm228 = vcmp.lt.s32.totalorder %v227, 0
    %v229 = vsub.s32 0, %v227
    %v230 = vsel %vm228, %v229, %v227
    %v231 = vclz %v230
    %v232 = vsub.s32 %v231, 2
    %vm233 = vcmp.gt.s32.totalorder 0, %v232
    %v234 = vsel %vm233, 0, %v232
    %v235 = vsub.s32 32, %v234
    %v236 = vshll.u32 %v227, %v234
    %v237 = vshrl.u32 %v219, %v235
    %v238 = vor.u32 %v236, %v237
    %v239 = vsub.s32 4294967266, %v234
    %v240 = vadd.s32 %v239, 127
    %v241 = vshll.u32 %v240, 23
    %v242 = vor.u32 4788187, %v241
    %v243 = vand.u32 2147483647, %v242
    %v245 = vcvt.s32.f32 %v238
    %v246 = vmul.f32 %v245, %v243
    %v247 = vxor.u32 %v246, 2147483648
    %v248 = vsel %vm165, %v247, %v246
    %v249 = vsub.s32 4, %v225
    %v250 = vsel %vm165, %v249, %v225
    %v251 = vsel %vm164, %v59, %v248
    %v252 = vsel %vm164, 0, %v250
    %v253 = vcosq.f32.pop %v251
    %v254 = vsinq.f32.pop %v251
    %vm255 = vweird.f32 %v59
    %v256 = vand.u32 %v252, 3
    %vm257 = vcmp.lt.s32.totalorder %v256, 2
    %vm258 = vcmp.eq.s32.totalorder %v256, 0
    %v259 = vxor.u32 %v254, 2147483648
    %v260 = vsel %vm258, %v253, %v259
    %vm261 = vcmp.eq.s32.totalorder %v256, 2
    %v262 = vxor.u32 %v253, 2147483648
    %v263 = vsel %vm261, %v262, %v254
    %v264 = vsel %vm257, %v260, %v263
    %v265 = vsel %vm255, nan, %v264
    %v266 = vld [vmem:[%s3] sm:$0xff]
    %v267 = vld [vmem:[%s3 + $0x8] sm:$0xff]
    %v268 = vld [vmem:[%s3 + $0x10] sm:$0xff]
    %v269 = vld [vmem:[%s3 + $0x18] sm:$0xff]
    %v270 = vld [vmem:[%s4] sm:$0x1]
    %v272 = vlaneseq
    %v273 = vshrl.u32 %v272, 7
    %v274 = vsub.s32 0, %v273
    %v275 = vrot.slane %v270, %v274
    %vm277 = vcmask 261120
    %v279 = vsel %vm277, %v162, 0
    %v282 = vsel %vm277, %v265, 0
    %284 = vmatprep.subr.mxu0 0.0
    %285 = vmatpush1.msra.mxu0 %v266
    %286 = vmatprep.subr.mxu0 0.0
    %287 = vmatpush1.msra.mxu0 %v267
    %288 = vmatprep.subr.mxu0 0.0
    %289 = vmatpush1.msra.mxu0 %v268
    %290 = vmatprep.subr.mxu0 0.0
    %291 = vmatpush1.msra.mxu0 %v269
    %292 = vmatprep.subr.mxu0 0.0
    %293 = vmatpush1.msra.mxu0 0.0
    %294 = vmatprep.subr.mxu0 0.0
    %295 = vmatpush1.msra.mxu0 0.0
    %296 = vmatprep.subr.mxu0 0.0
    %297 = vmatpush1.msra.mxu0 0.0
    %298 = vmatprep.subr.mxu0 0.0
    %299 = vmatpush1.msra.mxu0 0.0
    %300 = vmatprep.subr.mxu0 0.0
    %301 = vmatpush1.msra.mxu0 0.0
    %302 = vmatprep.subr.mxu0 0.0
    %303 = vmatpush1.msra.mxu0 0.0
    %304 = vmatprep.subr.mxu0 0.0
    %305 = vmatpush1.msra.mxu0 0.0
    %306 = vmatprep.subr.mxu0 0.0
    %307 = vmatpush1.msra.mxu0 0.0
    %308 = vmatprep.subr.mxu0 0.0
    %309 = vmatpush1.msra.mxu0 0.0
    %310 = vmatprep.subr.mxu0 0.0
    %311 = vmatpush1.msra.mxu0 0.0
    %312 = vmatprep.subr.mxu0 0.0
    %313 = vmatpush1.msra.mxu0 0.0
    %314 = vmatprep.subr.mxu0 0.0
    %315 = vmatpush1.msra.mxu0 0.0
    %316 = vmatprep.subr.mxu0 0.0
    %317 = vmatpush1.msra.mxu0 0.0
    %318 = vmatprep.subr.mxu0 0.0
    %319 = vmatpush1.msra.mxu0 0.0
    %320 = vmatprep.subr.mxu0 0.0
    %321 = vmatpush1.msra.mxu0 0.0
    %322 = vmatprep.subr.mxu0 0.0
    %323 = vmatpush1.msra.mxu0 0.0
    %324 = vmatprep.subr.mxu0 0.0
    %325 = vmatpush1.msra.mxu0 0.0
    %326 = vmatprep.subr.mxu0 0.0
    %327 = vmatpush1.msra.mxu0 0.0
    %328 = vmatprep.subr.mxu0 0.0
    %329 = vmatpush1.msra.mxu0 0.0
    %330 = vmatprep.subr.mxu0 0.0
    %331 = vmatpush1.msra.mxu0 0.0
    %332 = vmatprep.subr.mxu0 0.0
    %333 = vmatpush1.msra.mxu0 0.0
    %334 = vmatprep.subr.mxu0 0.0
    %335 = vmatpush1.msra.mxu0 0.0
    %336 = vmatprep.subr.mxu0 0.0
    %337 = vmatpush1.msra.mxu0 0.0
    %338 = vmatprep.subr.mxu0 0.0
    %339 = vmatpush1.msra.mxu0 0.0
    %340 = vmatprep.subr.mxu0 0.0
    %341 = vmatpush1.msra.mxu0 0.0
    %342 = vmatprep.subr.mxu0 0.0
    %343 = vmatpush1.msra.mxu0 0.0
    %344 = vmatprep.subr.mxu0 0.0
    %345 = vmatpush1.msra.mxu0 0.0
    %346 = vmatprep.subr.mxu0 0.0
    %347 = vmatpush1.msra.mxu0 0.0
    %348 = vmatprep.mubr.f32.mxu0 0.0
    %349 = vmatmul.mubr.f32.gmra.mrb[0].mxu0 %v279
    %v350 = vpop.f32.mrb[0].mxu0
    %v351 = vadd.f32 %v275, %v350
    %v352 = vpop.f32.mrb[0].mxu0
    %353 = vmatprep.mubr.f32.mxu0 0.0
    %354 = vmatmul.mubr.f32.gmra.mrb[0].mxu0 %v282
    %v355 = vpop.f32.mrb[0].mxu0
    %v356 = vadd.f32 %v275, %v355
    %v357 = vpop.f32.mrb[0].mxu0
    %358 = vdwg.mxu0
    %v359 = vsub.f32 0.0, %v351
    %v360 = vsub.f32 0.0, %v356
    %v361 = vmul.f32 %v359, 1.442695
    %v362 = vpow.pop %v361
    %v363 = vmul.f32 %v360, 1.442695
    %v364 = vpow.pop %v363
    %v365 = vadd.f32 %v362, 1.0
    %v366 = vadd.f32 %v364, 1.0
    %v367 = vrcp.pop %v365
    %v368 = vmul.f32 1.0, %v367
    %v369 = vrcp.pop %v366
    %v370 = vmul.f32 1.0, %v369
    %v371 = vmul.f32 %v351, %v368
    %v372 = vmul.f32 %v356, %v370
    %v373 = vld [vmem:[%s5] sm:$0xff]
    %v374 = vld [vmem:[%s5 + $0x8] sm:$0xff]
    %v375 = vld [vmem:[%s5 + $0x10] sm:$0xff]
    %v376 = vld [vmem:[%s5 + $0x18] sm:$0xff]
    %v377 = vld [vmem:[%s5 + $0x20] sm:$0xff]
    %v378 = vld [vmem:[%s5 + $0x28] sm:$0xff]
    %v379 = vld [vmem:[%s5 + $0x30] sm:$0xff]
    %v380 = vld [vmem:[%s5 + $0x38] sm:$0xff]
    %v381 = vld [vmem:[%s5 + $0x40] sm:$0xff]
    %v382 = vld [vmem:[%s5 + $0x48] sm:$0xff]
    %v383 = vld [vmem:[%s5 + $0x50] sm:$0xff]
    %v384 = vld [vmem:[%s5 + $0x58] sm:$0xff]
    %v385 = vld [vmem:[%s5 + $0x60] sm:$0xff]
    %v386 = vld [vmem:[%s5 + $0x68] sm:$0xff]
    %v387 = vld [vmem:[%s5 + $0x70] sm:$0xff]
    %v388 = vld [vmem:[%s5 + $0x78] sm:$0xff]
    %v389 = vld [vmem:[%s6] sm:$0x1]
    %v391 = vlaneseq
    %v392 = vshrl.u32 %v391, 7
    %v393 = vsub.s32 0, %v392
    %v394 = vrot.slane %v389, %v393
    %396 = vmatprep.subr.mxu0 0.0
    %397 = vmatpush1.msra.mxu0 %v373
    %398 = vmatprep.subr.mxu0 0.0
    %399 = vmatpush1.msra.mxu0 %v374
    %400 = vmatprep.subr.mxu0 0.0
    %401 = vmatpush1.msra.mxu0 %v375
    %402 = vmatprep.subr.mxu0 0.0
    %403 = vmatpush1.msra.mxu0 %v376
    %404 = vmatprep.subr.mxu0 0.0
    %405 = vmatpush1.msra.mxu0 %v377
    %406 = vmatprep.subr.mxu0 0.0
    %407 = vmatpush1.msra.mxu0 %v378
    %408 = vmatprep.subr.mxu0 0.0
    %409 = vmatpush1.msra.mxu0 %v379
    %410 = vmatprep.subr.mxu0 0.0
    %411 = vmatpush1.msra.mxu0 %v380
    %412 = vmatprep.subr.mxu0 0.0
    %413 = vmatpush1.msra.mxu0 %v381
    %414 = vmatprep.subr.mxu0 0.0
    %415 = vmatpush1.msra.mxu0 %v382
    %416 = vmatprep.subr.mxu0 0.0
    %417 = vmatpush1.msra.mxu0 %v383
    %418 = vmatprep.subr.mxu0 0.0
    %419 = vmatpush1.msra.mxu0 %v384
    %420 = vmatprep.subr.mxu0 0.0
    %421 = vmatpush1.msra.mxu0 %v385
    %422 = vmatprep.subr.mxu0 0.0
    %423 = vmatpush1.msra.mxu0 %v386
    %424 = vmatprep.subr.mxu0 0.0
    %425 = vmatpush1.msra.mxu0 %v387
    %426 = vmatprep.subr.mxu0 0.0
    %427 = vmatpush1.msra.mxu0 %v388
    %428 = vmatprep.subr.mxu0 0.0
    %429 = vmatpush1.msra.mxu0 0.0
    %430 = vmatprep.subr.mxu0 0.0
    %431 = vmatpush1.msra.mxu0 0.0
    %432 = vmatprep.subr.mxu0 0.0
    %433 = vmatpush1.msra.mxu0 0.0
    %434 = vmatprep.subr.mxu0 0.0
    %435 = vmatpush1.msra.mxu0 0.0
    %436 = vmatprep.subr.mxu0 0.0
    %437 = vmatpush1.msra.mxu0 0.0
    %438 = vmatprep.subr.mxu0 0.0
    %439 = vmatpush1.msra.mxu0 0.0
    %440 = vmatprep.subr.mxu0 0.0
    %441 = vmatpush1.msra.mxu0 0.0
    %442 = vmatprep.subr.mxu0 0.0
    %443 = vmatpush1.msra.mxu0 0.0
    %444 = vmatprep.subr.mxu0 0.0
    %445 = vmatpush1.msra.mxu0 0.0
    %446 = vmatprep.subr.mxu0 0.0
    %447 = vmatpush1.msra.mxu0 0.0
    %448 = vmatprep.subr.mxu0 0.0
    %449 = vmatpush1.msra.mxu0 0.0
    %450 = vmatprep.subr.mxu0 0.0
    %451 = vmatpush1.msra.mxu0 0.0
    %452 = vmatprep.subr.mxu0 0.0
    %453 = vmatpush1.msra.mxu0 0.0
    %454 = vmatprep.subr.mxu0 0.0
    %455 = vmatpush1.msra.mxu0 0.0
    %456 = vmatprep.subr.mxu0 0.0
    %457 = vmatpush1.msra.mxu0 0.0
    %458 = vmatprep.subr.mxu0 0.0
    %459 = vmatpush1.msra.mxu0 0.0
    %460 = vmatprep.mubr.f32.mxu0 0.0
    %461 = vmatmul.mubr.f32.gmra.mrb[0].mxu0 %v371
    %v462 = vpop.f32.mrb[0].mxu0
    %v463 = vadd.f32 %v394, %v462
    %v464 = vpop.f32.mrb[0].mxu0
    %465 = vmatprep.mubr.f32.mxu0 0.0
    %466 = vmatmul.mubr.f32.gmra.mrb[0].mxu0 %v372
    %v467 = vpop.f32.mrb[0].mxu0
    %v468 = vadd.f32 %v394, %v467
    %v469 = vpop.f32.mrb[0].mxu0
    %470 = vdwg.mxu0
    %v471 = vld [vmem:[%s7] sm:$0xff]
    %v472 = vld [vmem:[%s7 + $0x8] sm:$0xff]
    %v473 = vadd.f32 %v471, %v463
    %v474 = vadd.f32 %v472, %v468
    %475 = vst [vmem:[#allocation2] sm:$0xff] %v473
    %476 = vst [vmem:[#allocation2 + $0x8] sm:$0xff] %v474
    // Predicated region
    $region34: #{sinusoidal_conditioning_forward.1} parent=1 // pred_check
      _
    $region35: #{sinusoidal_conditioning_forward.1} parent=1 // pred_check_branch
      %478 = sbr.rel (0) target = $region37
    $region36: #{sinusoidal_conditioning_forward.1} parent=1 // pred_region
      %s480 = ssub.s32 256, 256
      %481 = vsyncadd [#allocation3], %s480
      %s482 = sshll.u32 [#allocation2], 4
      %s483 = int_to_ptr.vmem [resolvable:$true] %s482
      %488 = dma.vmem_to_hbm [thread:$0]  %s483, 256, %s8, [#allocation3], 128, 128, 8
    $region37: #{sinusoidal_conditioning_forward.1} parent=1 // pred_fallthru
      _
    // Predicated region
    $region38: #{sinusoidal_conditioning_forward.1} parent=1 // pred_check
      _
    $region39: #{sinusoidal_conditioning_forward.1} parent=1 // pred_check_branch
      %490 = sbr.rel (0) target = $region41
    $region40: #{sinusoidal_conditioning_forward.1} parent=1 // pred_region
      %491 = dma.done [#allocation3], 256
    $region41: #{sinusoidal_conditioning_forward.1} parent=1 // pred_fallthru
      _
    %492 = vsyncpa [#allocation3], 1

</llo_original>
